<compile_context>
chip_gen: v5e
topology: v5e:2x2
jax: 0.10.0
libtpu: 0.0.40
codegen_flags: <defaults>
</compile_context>

<pallas_src>
import jax
import jax.numpy as jnp
from jax.experimental import pallas as pl
from jax.experimental.pallas import tpu as pltpu


def _round_up(x, m):
    return ((x + m - 1) // m) * m


def yolov3_fc_kernel(x_ref, w1_ref, b1_ref, w2_ref, b2_ref, o_ref):
    # x: (TB, 5) f32 ; w1: (5, 128) f32 ; b1: (1, 128) f32
    # w2: (128, 256) bf16 ; b2: (1, 256) f32 ; o: (TB, 256)
    x = x_ref[...]
    w1 = w1_ref[...]

    # --- Linear(5, 128) on the VPU ------------------------------------------
    # 5 rank-1 broadcast FMAs; bias folded into the first update (saves one
    # full-width VALU add).  This layer is fully hidden under HBM time.
    h = b1_ref[...] + x[:, 0:1] * w1[0:1, :]
    for k in range(1, 5):                       # static unroll, 4 more FMAs
        h = h + x[:, k:k + 1] * w1[k:k + 1, :]

    # LeakyReLU(0.1) as max(h, 0.1*h): 2 VALU ops instead of cmp+mul+select.
    h = jnp.maximum(h, jnp.float32(0.1) * h)

    # --- Linear(128, 256) on the MXU (bf16 inputs, f32 accumulation) --------
    y = jnp.dot(h.astype(jnp.bfloat16), w2_ref[...],
                preferred_element_type=jnp.float32)
    y = y + b2_ref[...]

    o_ref[...] = y.astype(o_ref.dtype)


def yolov3_fc(x, w1, b1, w2, b2, *, tb=2048, out_dtype=jnp.float32):
    """Forward pass. x: (B, ...) with prod(trailing dims) == 5."""
    B = x.shape[0]
    xf = x.reshape(B, -1).astype(jnp.float32)          # nn.Flatten()
    assert xf.shape[1] == 5, f"expected 5 flattened features, got {xf.shape[1]}"

    # Batch tile: at most `tb`, 8-aligned.  No padding of x / slicing of out:
    # Pallas clips the ragged last block (garbage rows are computed but never
    # stored; there are no cross-row reductions so this is safe).
    TB = min(int(tb), _round_up(B, 8))
    n_steps = pl.cdiv(B, TB)
    # Prefer an even (>=2) number of grid steps when the batch splits anyway,
    # so both of v7x's TensorCores get balanced work via "parallel".
    if n_steps > 1 and n_steps % 2 == 1:
        n_steps += 1
        TB = min(TB, _round_up(pl.cdiv(B, n_steps), 8))
    grid = (pl.cdiv(B, TB),)

    w1 = w1.astype(jnp.float32)
    b1 = b1.reshape(1, 128).astype(jnp.float32)
    w2_bf = w2.astype(jnp.bfloat16)                    # MXU path runs in bf16
    b2 = b2.reshape(1, 256).astype(jnp.float32)

    out_itemsize = jnp.dtype(out_dtype).itemsize
    flops = 2 * B * (5 * 128 + 128 * 256)
    bytes_accessed = (B * 5 * 4 + B * 256 * out_itemsize     # x in, out
                      + 5 * 128 * 4 + 128 * 4                 # w1, b1
                      + 128 * 256 * 2 + 256 * 4)              # w2 (bf16), b2

    return pl.pallas_call(
        yolov3_fc_kernel,
        out_shape=jax.ShapeDtypeStruct((B, 256), out_dtype),
        grid=grid,
        in_specs=[
            pl.BlockSpec((TB, 5), lambda i: (i, 0)),          # x  : batch-tiled
            # Constant index_maps below -> blocks stay VMEM-resident across
            # grid steps (Pallas skips re-DMA when the block index is unchanged).
            pl.BlockSpec((5, 128), lambda i: (0, 0)),         # w1 : resident
            pl.BlockSpec((1, 128), lambda i: (0, 0)),         # b1 : resident
            pl.BlockSpec((128, 256), lambda i: (0, 0)),       # w2 : resident
            pl.BlockSpec((1, 256), lambda i: (0, 0)),         # b2 : resident
        ],
        out_specs=pl.BlockSpec((TB, 256), lambda i: (i, 0)),  # lane-dense N=256
        compiler_params=pltpu.CompilerParams(
            dimension_semantics=("parallel",),                # megacore on v7x
            vmem_limit_bytes=32 * 1024 * 1024),               # v5e default is 16 MiB
        cost_estimate=pl.CostEstimate(
            flops=flops, transcendentals=0, bytes_accessed=bytes_accessed),
    )(xf, w1, b1, w2_bf, b2)


def init_params(key):
    """Deterministic synthetic parameters matching nn.Linear shapes.

    PyTorch stores Linear weight as (out, in); we store the transpose
    (in, out) so the kernel does x @ W directly.
    """
    k1, k2, k3, k4 = jax.random.split(key, 4)
    # Linear(5, 128)
    bound1 = 1.0 / jnp.sqrt(5.0)
    w1 = jax.random.uniform(k1, (5, 128), jnp.float32, -bound1, bound1)
    b1 = jax.random.uniform(k2, (1, 128), jnp.float32, -bound1, bound1)
    # Linear(128, 256)
    bound2 = 1.0 / jnp.sqrt(128.0)
    w2 = jax.random.uniform(k3, (128, 256), jnp.float32, -bound2, bound2)
    b2 = jax.random.uniform(k4, (1, 256), jnp.float32, -bound2, bound2)
    return w1, b1, w2, b2


def reference(x, w1, b1, w2, b2):
    xf = x.reshape(x.shape[0], -1).astype(jnp.float32)
    h = xf @ w1 + b1
    h = jnp.where(h >= 0, h, 0.1 * h)
    return h @ w2 + b2


if __name__ == "__main__":
    key = jax.random.PRNGKey(0)
    kx, kp, kx2 = jax.random.split(key, 3)

    w1, b1, w2, b2 = init_params(kp)

    # detect_features_ : (B, 5) — flattens to 5 features per sample.
    B = 8
    x = jax.random.normal(kx, (B, 5), jnp.float32)
    out = jax.block_until_ready(yolov3_fc(x, w1, b1, w2, b2))
    ref = reference(x, w1, b1, w2, b2)
    assert out.shape == (B, 256), out.shape
    # bf16 MXU path -> slightly relaxed tolerance vs f32 reference.
    assert jnp.allclose(out, ref, atol=2e-2, rtol=2e-2), "mismatch vs JAX reference (B=8)"

    # Exercise the multi-step path: non-divisible B -> ragged last block
    # (clipped on store) + even-grid adjustment (3 -> 4 steps, TB=80).
    B2 = 300
    x2 = jax.random.normal(kx2, (B2, 5), jnp.float32)
    out2 = jax.block_until_ready(yolov3_fc(x2, w1, b1, w2, b2, tb=128))
    ref2 = reference(x2, w1, b1, w2, b2)
    assert out2.shape == (B2, 256), out2.shape
    assert jnp.allclose(out2, ref2, atol=2e-2, rtol=2e-2), "mismatch vs JAX reference (B=300)"

    print("KERNEL_OK")
</pallas_src>

<mosaic_0001>
module attributes {stable_mosaic.version = 11 : i64} {
  func.func @yolov3_fc_kernel(%arg0: i32, %arg1: memref<8x5xf32, #tpu.memory_space<vmem>>, %arg2: memref<5x128xf32, #tpu.memory_space<vmem>>, %arg3: memref<1x128xf32, #tpu.memory_space<vmem>>, %arg4: memref<128x256xbf16, #tpu.memory_space<vmem>>, %arg5: memref<1x256xf32, #tpu.memory_space<vmem>>, %arg6: memref<8x256xf32, #tpu.memory_space<vmem>>) attributes {dimension_semantics = [#tpu.dimension_semantics<parallel>], iteration_bounds = array<i64: 1>, scalar_prefetch = 0 : i64, scratch_operands = 0 : i64, tpu.core_type = #tpu.core_type<tc>, window_params = [{transform_indices = @transform_0, window_bounds = array<i64: 8, 5>}, {pipeline_mode = #tpu.pipeline_mode<synchronous>, transform_indices = @transform_1, window_bounds = array<i64: 5, 128>}, {pipeline_mode = #tpu.pipeline_mode<synchronous>, transform_indices = @transform_2, window_bounds = array<i64: 1, 128>}, {pipeline_mode = #tpu.pipeline_mode<synchronous>, transform_indices = @transform_3, window_bounds = array<i64: 128, 256>}, {pipeline_mode = #tpu.pipeline_mode<synchronous>, transform_indices = @transform_4, window_bounds = array<i64: 1, 256>}, {transform_indices = @transform_5, window_bounds = array<i64: 8, 256>}]} {
    %c0 = arith.constant 0 : index
    %c0_0 = arith.constant 0 : index
    %0 = vector.load %arg1[%c0, %c0_0] : memref<8x5xf32, #tpu.memory_space<vmem>>, vector<8x5xf32>
    %c0_1 = arith.constant 0 : index
    %c0_2 = arith.constant 0 : index
    %1 = vector.load %arg2[%c0_1, %c0_2] : memref<5x128xf32, #tpu.memory_space<vmem>>, vector<5x128xf32>
    %c0_3 = arith.constant 0 : index
    %c0_4 = arith.constant 0 : index
    %2 = vector.load %arg3[%c0_3, %c0_4] : memref<1x128xf32, #tpu.memory_space<vmem>>, vector<1x128xf32>
    %3 = vector.extract_strided_slice %0 {offsets = [0, 0], sizes = [8, 1], strides = [1, 1]} : vector<8x5xf32> to vector<8x1xf32>
    %4 = vector.extract_strided_slice %1 {offsets = [0, 0], sizes = [1, 128], strides = [1, 1]} : vector<5x128xf32> to vector<1x128xf32>
    %5 = vector.broadcast %3 : vector<8x1xf32> to vector<8x128xf32>
    %6 = vector.broadcast %4 : vector<1x128xf32> to vector<8x128xf32>
    %7 = arith.mulf %5, %6 : vector<8x128xf32>
    %8 = vector.broadcast %2 : vector<1x128xf32> to vector<8x128xf32>
    %9 = arith.addf %8, %7 : vector<8x128xf32>
    %10 = vector.extract_strided_slice %0 {offsets = [0, 1], sizes = [8, 1], strides = [1, 1]} : vector<8x5xf32> to vector<8x1xf32>
    %11 = vector.extract_strided_slice %1 {offsets = [1, 0], sizes = [1, 128], strides = [1, 1]} : vector<5x128xf32> to vector<1x128xf32>
    %12 = vector.broadcast %10 : vector<8x1xf32> to vector<8x128xf32>
    %13 = vector.broadcast %11 : vector<1x128xf32> to vector<8x128xf32>
    %14 = arith.mulf %12, %13 : vector<8x128xf32>
    %15 = arith.addf %9, %14 : vector<8x128xf32>
    %16 = vector.extract_strided_slice %0 {offsets = [0, 2], sizes = [8, 1], strides = [1, 1]} : vector<8x5xf32> to vector<8x1xf32>
    %17 = vector.extract_strided_slice %1 {offsets = [2, 0], sizes = [1, 128], strides = [1, 1]} : vector<5x128xf32> to vector<1x128xf32>
    %18 = vector.broadcast %16 : vector<8x1xf32> to vector<8x128xf32>
    %19 = vector.broadcast %17 : vector<1x128xf32> to vector<8x128xf32>
    %20 = arith.mulf %18, %19 : vector<8x128xf32>
    %21 = arith.addf %15, %20 : vector<8x128xf32>
    %22 = vector.extract_strided_slice %0 {offsets = [0, 3], sizes = [8, 1], strides = [1, 1]} : vector<8x5xf32> to vector<8x1xf32>
    %23 = vector.extract_strided_slice %1 {offsets = [3, 0], sizes = [1, 128], strides = [1, 1]} : vector<5x128xf32> to vector<1x128xf32>
    %24 = vector.broadcast %22 : vector<8x1xf32> to vector<8x128xf32>
    %25 = vector.broadcast %23 : vector<1x128xf32> to vector<8x128xf32>
    %26 = arith.mulf %24, %25 : vector<8x128xf32>
    %27 = arith.addf %21, %26 : vector<8x128xf32>
    %28 = vector.extract_strided_slice %0 {offsets = [0, 4], sizes = [8, 1], strides = [1, 1]} : vector<8x5xf32> to vector<8x1xf32>
    %29 = vector.extract_strided_slice %1 {offsets = [4, 0], sizes = [1, 128], strides = [1, 1]} : vector<5x128xf32> to vector<1x128xf32>
    %30 = vector.broadcast %28 : vector<8x1xf32> to vector<8x128xf32>
    %31 = vector.broadcast %29 : vector<1x128xf32> to vector<8x128xf32>
    %32 = arith.mulf %30, %31 : vector<8x128xf32>
    %33 = arith.addf %27, %32 : vector<8x128xf32>
    %cst = arith.constant 1.000000e-01 : f32
    %34 = vector.broadcast %cst : f32 to vector<8x128xf32>
    %35 = arith.mulf %34, %33 : vector<8x128xf32>
    %36 = arith.maximumf %33, %35 : vector<8x128xf32>
    %37 = arith.truncf %36 : vector<8x128xf32> to vector<8x128xbf16>
    %c0_5 = arith.constant 0 : index
    %c0_6 = arith.constant 0 : index
    %38 = vector.load %arg4[%c0_5, %c0_6] : memref<128x256xbf16, #tpu.memory_space<vmem>>, vector<128x256xbf16>
    %cst_7 = arith.constant dense<0.000000e+00> : vector<8x256xf32>
    %39 = tpu.matmul %37, %38, %cst_7 {dimension_numbers = #tpu.dot_dimension_numbers<[1], [0], [0], [1], [0, 0, 1, 1], [], []>} : vector<8x128xbf16>, vector<128x256xbf16>, vector<8x256xf32> -> vector<8x256xf32>
    %c0_8 = arith.constant 0 : index
    %c0_9 = arith.constant 0 : index
    %40 = vector.load %arg5[%c0_8, %c0_9] : memref<1x256xf32, #tpu.memory_space<vmem>>, vector<1x256xf32>
    %41 = vector.broadcast %40 : vector<1x256xf32> to vector<8x256xf32>
    %42 = arith.addf %39, %41 : vector<8x256xf32>
    %c0_10 = arith.constant 0 : index
    %c0_11 = arith.constant 0 : index
    %43 = vector.load %arg6[%c0_10, %c0_11] : memref<8x256xf32, #tpu.memory_space<vmem>>, vector<8x256xf32>
    tpu.vector_store %arg6[%c0_10, %c0_11], %42 {strides = array<i32>} : memref<8x256xf32, #tpu.memory_space<vmem>>, vector<8x256xf32>,
    return
  }
  func.func @transform_0(%arg0: i32) -> (i32, i32) {
    %c0_i32 = arith.constant 0 : i32
    %c0_i32_0 = arith.constant 0 : i32
    return %arg0, %c0_i32 : i32, i32
  }
  func.func @transform_1(%arg0: i32) -> (i32, i32) {
    %c0_i32 = arith.constant 0 : i32
    %c0_i32_0 = arith.constant 0 : i32
    %c0_i32_1 = arith.constant 0 : i32
    return %c0_i32, %c0_i32_0 : i32, i32
  }
  func.func @transform_2(%arg0: i32) -> (i32, i32) {
    %c0_i32 = arith.constant 0 : i32
    %c0_i32_0 = arith.constant 0 : i32
    %c0_i32_1 = arith.constant 0 : i32
    return %c0_i32, %c0_i32_0 : i32, i32
  }
  func.func @transform_3(%arg0: i32) -> (i32, i32) {
    %c0_i32 = arith.constant 0 : i32
    %c0_i32_0 = arith.constant 0 : i32
    %c0_i32_1 = arith.constant 0 : i32
    return %c0_i32, %c0_i32_0 : i32, i32
  }
  func.func @transform_4(%arg0: i32) -> (i32, i32) {
    %c0_i32 = arith.constant 0 : i32
    %c0_i32_0 = arith.constant 0 : i32
    %c0_i32_1 = arith.constant 0 : i32
    return %c0_i32, %c0_i32_0 : i32, i32
  }
  func.func @transform_5(%arg0: i32) -> (i32, i32) {
    %c0_i32 = arith.constant 0 : i32
    %c0_i32_0 = arith.constant 0 : i32
    return %arg0, %c0_i32 : i32, i32
  }
}

</mosaic_0001>

<llo_original>
// kernel: tpu_custom_call.1
$region0: #{tpu_custom_call.1}
  #allocation0 [shape = 'u32[]', space=smem, size = 0x4, offset = 0x4, fixed_abs, tag = 'smem constant byte address 0x4 - core index']
  #allocation1 [shape = 'u32[72,128]{1,0:T(1,128)}', space=vmem, size = 0x9000, scoped, tag = 'internal scratch']
  %s0 = inlined_call_operand.hbm [shape: f32[8,5], index: 0, kind: input, shape index: {}]
  %s1 = inlined_call_operand.hbm [shape: f32[5,128], index: 1, kind: input, shape index: {}]
  %s2 = inlined_call_operand.vmem [shape: f32[1,128], index: 2, kind: input, shape index: {}]
  %s3 = inlined_call_operand.hbm [shape: bf16[128,256], index: 3, kind: input, shape index: {}]
  %s4 = inlined_call_operand.vmem [shape: f32[1,256], index: 4, kind: input, shape index: {}]
  %s5 = inlined_call_operand.hbm [shape: f32[8,256], index: 5, kind: output, shape index: {}]
  %s6 = sld [smem:[#allocation0]]
  $region42: #{tpu_custom_call.1} parent=0
    _
  %s8 = ssub.s32 1, %s6
  %s9 = scalar_select 0, %s8, %s6
  $region1: #{tpu_custom_call.1} parent=0
    #allocation2 [shape = 'u8[4096]{0}', space=vmem, size = 0x1000, scoped, tag = 'input window, operand 0, single buffered']
    #allocation3 [shape = 's32[1]{0}', space=sflag, size = 0x4, scoped, tag = 'scoped memory for tpu_custom_call.1']
    #allocation4 [shape = 's32[1]{0}', space=sflag, size = 0x4, scoped, tag = 'scoped memory for tpu_custom_call.1']
    #allocation5 [shape = 'u8[4096]{0}', space=vmem, size = 0x1000, scoped, tag = 'input window, operand 1, single buffered']
    #allocation6 [shape = 's32[1]{0}', space=sflag, size = 0x4, scoped, tag = 'scoped memory for tpu_custom_call.1']
    #allocation7 [shape = 'u8[65536]{0}', space=vmem, size = 0x10000, scoped, tag = 'input window, operand 3, single buffered']
    #allocation8 [shape = 'u8[8192]{0}', space=vmem, size = 0x2000, scoped, tag = 'output window, operand 0, single buffered']
    %10 = vsyncpa [#allocation3], 0
    %11 = vsyncpa [#allocation6], 0
    %12 = vsyncpa [#allocation4], 0
    // Predicated region
    $region2: #{tpu_custom_call.1} parent=1 // pred_check
      _
    $region3: #{tpu_custom_call.1} parent=1 // pred_check_branch
      %14 = sbr.rel (0) target = $region5
    $region4: #{tpu_custom_call.1} parent=1 // pred_region
      %16 = vsyncadd [#allocation3], 0
      %s18 = sshll.u32 %s0, 4
      %s19 = int_to_ptr.hbm [resolvable:$true] %s18
      %s20 = sshll.u32 [#allocation2], 4
      %s21 = int_to_ptr.vmem [resolvable:$true] %s20
      %23 = dma.hbm_to_vmem [thread:$0]  %s19, 128, %s21, [#allocation3]
    $region5: #{tpu_custom_call.1} parent=1 // pred_fallthru
      _
    // Predicated region
    $region6: #{tpu_custom_call.1} parent=1 // pred_check
      _
    $region7: #{tpu_custom_call.1} parent=1 // pred_check_branch
      %25 = sbr.rel (0) target = $region9
    $region8: #{tpu_custom_call.1} parent=1 // pred_region
      %27 = vsyncadd [#allocation6], 0
      %s29 = sshll.u32 %s1, 4
      %s30 = int_to_ptr.hbm [resolvable:$true] %s29
      %s31 = sshll.u32 [#allocation5], 4
      %s32 = int_to_ptr.vmem [resolvable:$true] %s31
      %34 = dma.hbm_to_vmem [thread:$0]  %s30, 128, %s32, [#allocation6]
    $region9: #{tpu_custom_call.1} parent=1 // pred_fallthru
      _
    // Predicated region
    $region10: #{tpu_custom_call.1} parent=1 // pred_check
      _
    $region11: #{tpu_custom_call.1} parent=1 // pred_check_branch
      %36 = sbr.rel (0) target = $region13
    $region12: #{tpu_custom_call.1} parent=1 // pred_region
      _
    $region13: #{tpu_custom_call.1} parent=1 // pred_fallthru
      _
    // Predicated region
    $region14: #{tpu_custom_call.1} parent=1 // pred_check
      _
    $region15: #{tpu_custom_call.1} parent=1 // pred_check_branch
      %38 = sbr.rel (0) target = $region17
    $region16: #{tpu_custom_call.1} parent=1 // pred_region
      %40 = vsyncadd [#allocation6], 0
      %s41 = sshll.u32 %s3, 4
      %s42 = int_to_ptr.hbm [resolvable:$true] %s41
      %s43 = sshll.u32 [#allocation7], 4
      %s44 = int_to_ptr.vmem [resolvable:$true] %s43
      %49 = dma.hbm_to_vmem [thread:$0]  %s42, 2048, %s44, [#allocation6], 128, 128, 8
    $region17: #{tpu_custom_call.1} parent=1 // pred_fallthru
      _
    // Predicated region
    $region18: #{tpu_custom_call.1} parent=1 // pred_check
      _
    $region19: #{tpu_custom_call.1} parent=1 // pred_check_branch
      %51 = sbr.rel (0) target = $region21
    $region20: #{tpu_custom_call.1} parent=1 // pred_region
      _
    $region21: #{tpu_custom_call.1} parent=1 // pred_fallthru
      _
    // Predicated region
    $region22: #{tpu_custom_call.1} parent=1 // pred_check
      _
    $region23: #{tpu_custom_call.1} parent=1 // pred_check_branch
      %53 = sbr.rel (0) target = $region25
    $region24: #{tpu_custom_call.1} parent=1 // pred_region
      %55 = dma.done [#allocation3], 128
    $region25: #{tpu_custom_call.1} parent=1 // pred_fallthru
      _
    // Predicated region
    $region26: #{tpu_custom_call.1} parent=1 // pred_check
      _
    $region27: #{tpu_custom_call.1} parent=1 // pred_check_branch
      %57 = sbr.rel (0) target = $region29
    $region28: #{tpu_custom_call.1} parent=1 // pred_region
      %59 = dma.done [#allocation6], 128
    $region29: #{tpu_custom_call.1} parent=1 // pred_fallthru
      _
    // Predicated region
    $region30: #{tpu_custom_call.1} parent=1 // pred_check
      _
    $region31: #{tpu_custom_call.1} parent=1 // pred_check_branch
      %61 = sbr.rel (0) target = $region33
    $region32: #{tpu_custom_call.1} parent=1 // pred_region
      %63 = dma.done [#allocation6], 2048
    $region33: #{tpu_custom_call.1} parent=1 // pred_fallthru
      _
    %v64 = vld [vmem:[#allocation2] sm:$0xff]
    %v65 = vld [vmem:[#allocation5] sm:$0x1f]
    %v66 = vld [vmem:[%s2] sm:$0x1]
    %68 = vset.pattern.permute.xlu0 0
    %69 = vperm.xlu0 %68, %v64
    %v70 = vpop.permute.xlu0 %69
    %v72 = vperm.slane %v65, 0
    %v73 = vmul.f32 %v70, %v72
    %v75 = vperm.slane %v66, 0
    %v77 = vadd.f32 %v75, %v73
    %78 = vset.pattern.permute.xlu0 1
    %79 = vperm.xlu0 %78, %v64
    %v80 = vpop.permute.xlu0 %79
    %v82 = vperm.slane %v65, 1
    %v83 = vmul.f32 %v80, %v82
    %v84 = vadd.f32 %v77, %v83
    %85 = vset.pattern.permute.xlu0 2
    %86 = vperm.xlu0 %85, %v64
    %v87 = vpop.permute.xlu0 %86
    %v89 = vperm.slane %v65, 2
    %v90 = vmul.f32 %v87, %v89
    %v91 = vadd.f32 %v84, %v90
    %92 = vset.pattern.permute.xlu0 3
    %93 = vperm.xlu0 %92, %v64
    %v94 = vpop.permute.xlu0 %93
    %v96 = vperm.slane %v65, 3
    %v97 = vmul.f32 %v94, %v96
    %v98 = vadd.f32 %v91, %v97
    %99 = vset.pattern.permute.xlu0 4
    %100 = vperm.xlu0 %99, %v64
    %v101 = vpop.permute.xlu0 %100
    %v103 = vperm.slane %v65, 4
    %v104 = vmul.f32 %v101, %v103
    %v105 = vadd.f32 %v98, %v104
    %v106 = vmul.f32 %v105, 0.1
    %v107 = vmax.f32 %v105, %v106
    %v108 = vpack.c.bf16 %v107, %v107
    %v109 = vld [vmem:[#allocation7] sm:$0xff]
    %v110 = vld [vmem:[#allocation7 + $0x8] sm:$0xff]
    %v111 = vld [vmem:[#allocation7 + $0x10] sm:$0xff]
    %v112 = vld [vmem:[#allocation7 + $0x18] sm:$0xff]
    %v113 = vld [vmem:[#allocation7 + $0x20] sm:$0xff]
    %v114 = vld [vmem:[#allocation7 + $0x28] sm:$0xff]
    %v115 = vld [vmem:[#allocation7 + $0x30] sm:$0xff]
    %v116 = vld [vmem:[#allocation7 + $0x38] sm:$0xff]
    %v117 = vld [vmem:[#allocation7 + $0x40] sm:$0xff]
    %v118 = vld [vmem:[#allocation7 + $0x48] sm:$0xff]
    %v119 = vld [vmem:[#allocation7 + $0x50] sm:$0xff]
    %v120 = vld [vmem:[#allocation7 + $0x58] sm:$0xff]
    %v121 = vld [vmem:[#allocation7 + $0x60] sm:$0xff]
    %v122 = vld [vmem:[#allocation7 + $0x68] sm:$0xff]
    %v123 = vld [vmem:[#allocation7 + $0x70] sm:$0xff]
    %v124 = vld [vmem:[#allocation7 + $0x78] sm:$0xff]
    %v125 = vld [vmem:[%s4] sm:$0x3]
    %v127 = vperm.slane %v125, 0
    %v128 = vperm.slane %v125, 1
    %v147 = vunpack.c.l.b16 %v109
    %v148 = vunpack.c.h.b16 %v109
    %v149 = vunpack.c.l.b16 %v110
    %v150 = vunpack.c.h.b16 %v110
    %v151 = vunpack.c.l.b16 %v111
    %v152 = vunpack.c.h.b16 %v111
    %v153 = vunpack.c.l.b16 %v112
    %v154 = vunpack.c.h.b16 %v112
    %v155 = vunpack.c.l.b16 %v113
    %v156 = vunpack.c.h.b16 %v113
    %v157 = vunpack.c.l.b16 %v114
    %v158 = vunpack.c.h.b16 %v114
    %v159 = vunpack.c.l.b16 %v115
    %v160 = vunpack.c.h.b16 %v115
    %v161 = vunpack.c.l.b16 %v116
    %v162 = vunpack.c.h.b16 %v116
    %v163 = vunpack.c.l.b16 %v117
    %v164 = vunpack.c.h.b16 %v117
    %v165 = vunpack.c.l.b16 %v118
    %v166 = vunpack.c.h.b16 %v118
    %v167 = vunpack.c.l.b16 %v119
    %v168 = vunpack.c.h.b16 %v119
    %v169 = vunpack.c.l.b16 %v120
    %v170 = vunpack.c.h.b16 %v120
    %v171 = vunpack.c.l.b16 %v121
    %v172 = vunpack.c.h.b16 %v121
    %v173 = vunpack.c.l.b16 %v122
    %v174 = vunpack.c.h.b16 %v122
    %v175 = vunpack.c.l.b16 %v123
    %v176 = vunpack.c.h.b16 %v123
    %v177 = vunpack.c.l.b16 %v124
    %v178 = vunpack.c.h.b16 %v124
    %v179 = vpack.c.b16 %v149, %v147
    %v180 = vpack.c.b16 %v150, %v148
    %v181 = vpack.c.b16 %v153, %v151
    %v182 = vpack.c.b16 %v154, %v152
    %v183 = vpack.c.b16 %v157, %v155
    %v184 = vpack.c.b16 %v158, %v156
    %v185 = vpack.c.b16 %v161, %v159
    %v186 = vpack.c.b16 %v162, %v160
    %v187 = vpack.c.b16 %v165, %v163
    %v188 = vpack.c.b16 %v166, %v164
    %v189 = vpack.c.b16 %v169, %v167
    %v190 = vpack.c.b16 %v170, %v168
    %v191 = vpack.c.b16 %v173, %v171
    %v192 = vpack.c.b16 %v174, %v172
    %v193 = vpack.c.b16 %v177, %v175
    %v194 = vpack.c.b16 %v178, %v176
    %211 = vmatpush.bf16.msra.mxu0 %v193
    %212 = vmatpush.bf16.msra.mxu0 %v191
    %213 = vmatpush.bf16.msra.mxu0 %v189
    %214 = vmatpush.bf16.msra.mxu0 %v187
    %215 = vmatpush.bf16.msra.mxu0 %v185
    %216 = vmatpush.bf16.msra.mxu0 %v183
    %217 = vmatpush.bf16.msra.mxu0 %v181
    %218 = vmatpush.bf16.msra.mxu0 %v179
    %219 = vmatmul.bf16.gmra.mxu0 %v108
    %v220 = vpop.f32.mrf.mxu0
    %v221 = vadd.f32 %v127, %v220
    %v222 = vpop.f32.mrf.mxu0
    %223 = vdwg.mxu0
    %224 = vmatpush.bf16.msra.mxu0 %v194
    %225 = vmatpush.bf16.msra.mxu0 %v192
    %226 = vmatpush.bf16.msra.mxu0 %v190
    %227 = vmatpush.bf16.msra.mxu0 %v188
    %228 = vmatpush.bf16.msra.mxu0 %v186
    %229 = vmatpush.bf16.msra.mxu0 %v184
    %230 = vmatpush.bf16.msra.mxu0 %v182
    %231 = vmatpush.bf16.msra.mxu0 %v180
    %232 = vmatmul.bf16.gmra.mxu0 %v108
    %v233 = vpop.f32.mrf.mxu0
    %v234 = vadd.f32 %v128, %v233
    %v235 = vpop.f32.mrf.mxu0
    %236 = vdwg.mxu0
    %237 = vst [vmem:[#allocation8] sm:$0xff] %v221
    %238 = vst [vmem:[#allocation8 + $0x8] sm:$0xff] %v234
    // Predicated region
    $region34: #{tpu_custom_call.1} parent=1 // pred_check
      _
    $region35: #{tpu_custom_call.1} parent=1 // pred_check_branch
      %240 = sbr.rel (0) target = $region37
    $region36: #{tpu_custom_call.1} parent=1 // pred_region
      %242 = vsyncadd [#allocation4], 0
      %s244 = sshll.u32 [#allocation8], 4
      %s245 = int_to_ptr.vmem [resolvable:$true] %s244
      %s246 = sshll.u32 %s5, 4
      %s247 = int_to_ptr.hbm [resolvable:$true] %s246
      %249 = dma.vmem_to_hbm [thread:$0]  %s245, 256, %s247, [#allocation4]
    $region37: #{tpu_custom_call.1} parent=1 // pred_fallthru
      _
    // Predicated region
    $region38: #{tpu_custom_call.1} parent=1 // pred_check
      _
    $region39: #{tpu_custom_call.1} parent=1 // pred_check_branch
      %251 = sbr.rel (0) target = $region41
    $region40: #{tpu_custom_call.1} parent=1 // pred_region
      %253 = dma.done [#allocation4], 256
    $region41: #{tpu_custom_call.1} parent=1 // pred_fallthru
      _
    %254 = vsyncpa [#allocation3], 1
    %255 = vsyncpa [#allocation6], 1
    %256 = vsyncpa [#allocation4], 1

</llo_original>
